<compile_context>
chip_gen: v5e
topology: v5e:2x2
jax: 0.10.0
libtpu: 0.0.40
codegen_flags: <defaults>
</compile_context>

<pallas_src>
import functools

import jax
import jax.numpy as jnp
from jax.experimental import pallas as pl
from jax.experimental.pallas import tpu as pltpu


def _round_up(x, m):
    return (x + m - 1) // m * m


def _pick_ff_tile(d_ff, cap=1024):
    """Largest lane-dense (multiple of 128) divisor of d_ff that is <= cap."""
    for c in (1024, 512, 256, 128):
        if c <= cap and c <= d_ff and d_ff % c == 0:
            return c
    return d_ff


# --------------------------------- kernel ------------------------------------
def _dense_act_dense_kernel(use_swish, has_bias, *refs):
    if has_bias:
        x_ref, wi_ref, wo_ref, bi_ref, bo_ref, out_ref, acc_ref = refs
    else:
        x_ref, wi_ref, wo_ref, out_ref, acc_ref = refs
        bi_ref = bo_ref = None

    f = pl.program_id(1)

    @pl.when(f == 0)
    def _init():
        acc_ref[...] = jnp.zeros_like(acc_ref)

    # wi projection for this d_ff slice (MXU, f32 accumulation).
    h = jnp.dot(x_ref[...], wi_ref[...], preferred_element_type=jnp.float32)
    if has_bias:
        h = h + bi_ref[...]                      # (1, tf) broadcast, f32

    # Activation in f32 (v5e VPU/EUP have no bf16).
    if use_swish:
        h = h * jax.nn.sigmoid(h)                # swish / SiLU
    else:
        h = jnp.maximum(h, 0.0)                  # ReLU

    # TODO(synk): nn.Dropout in training mode not implemented (eval: identity).

    # Partial wo projection for this d_ff slice, accumulated in f32.
    acc_ref[...] += jnp.dot(h.astype(wo_ref.dtype), wo_ref[...],
                            preferred_element_type=jnp.float32)

    @pl.when(f == pl.num_programs(1) - 1)
    def _finalize():
        y = acc_ref[...]
        if has_bias:
            y = y + bo_ref[...]                  # (1, D) broadcast, f32
        out_ref[...] = y.astype(out_ref.dtype)


# -------------------------------- wrapper -------------------------------------
def gptsan_dense_act_dense(hidden_states, params, *, use_swish,
                           weight_dtype=jnp.bfloat16, tm=None, tf=None):
    """hidden_states: (G, T, D). params: wi (D,F), wo (F,D), optional bi/bo.

    Linear weights are stored as (in, out) = torch_weight.T so y = x @ W + b.
    """
    Gn, Tn, Dm = hidden_states.shape
    wi = params["wi"]
    wo = params["wo"]
    Dff = wi.shape[1]
    assert wi.shape == (Dm, Dff) and wo.shape == (Dff, Dm)
    has_bias = "bi" in params
    out_dtype = hidden_states.dtype

    # Flatten groups x tokens into one lane-dense row slab.
    N = Gn * Tn
    x2d = hidden_states.reshape(N, Dm)

    # Row tile: cap at 256 rows (vreg pressure between the two dots),
    # sublane-aligned; pad rows so the grid always covers N.
    if tm is None:
        tm = 256 if N > 256 else _round_up(N, 8)
    Np = _round_up(N, tm)
    if Np != N:
        x2d = jnp.pad(x2d, ((0, Np - N), (0, 0)))

    # d_ff reduction tile.
    if tf is None:
        tf = _pick_ff_tile(Dff, cap=1024)
    assert Dff % tf == 0

    # Stream x / weights in bf16 (f32 accumulation stays in the kernel).
    x2d = x2d.astype(weight_dtype)
    wi = wi.astype(weight_dtype)
    wo = wo.astype(weight_dtype)

    in_arrays = [x2d, wi, wo]
    in_specs = [
        pl.BlockSpec((tm, Dm), lambda i, f: (i, 0)),   # x rows (revisited over f)
        pl.BlockSpec((Dm, tf), lambda i, f: (0, f)),   # wi slice, streamed
        pl.BlockSpec((tf, Dm), lambda i, f: (f, 0)),   # wo slice, streamed
    ]
    if has_bias:
        in_arrays += [params["bi"].reshape(1, Dff).astype(jnp.float32),
                      params["bo"].reshape(1, Dm).astype(jnp.float32)]
        in_specs += [
            pl.BlockSpec((1, tf), lambda i, f: (0, f)),
            pl.BlockSpec((1, Dm), lambda i, f: (0, 0)),
        ]

    kernel = functools.partial(_dense_act_dense_kernel, use_swish, has_bias)
    grid = (Np // tm, Dff // tf)

    # Rough VMEM need: double-buffered x/wi/wo/out tiles + f32 accumulator.
    wbytes = jnp.dtype(weight_dtype).itemsize
    vmem_bytes = (2 * (tm * Dm * wbytes + Dm * tf * wbytes + tf * Dm * wbytes
                       + tm * Dm * 4) + tm * Dm * 4 + 2 * (Dff + Dm) * 4)
    vmem_limit = int(min(max(2 * vmem_bytes, 16 * 1024 * 1024),
                         64 * 1024 * 1024))

    out2d = pl.pallas_call(
        kernel,
        out_shape=jax.ShapeDtypeStruct((Np, Dm), out_dtype),
        grid=grid,
        in_specs=in_specs,
        out_specs=pl.BlockSpec((tm, Dm), lambda i, f: (i, 0)),
        scratch_shapes=[pltpu.VMEM((tm, Dm), jnp.float32)],
        compiler_params=pltpu.CompilerParams(
            dimension_semantics=("parallel", "arbitrary"),
            vmem_limit_bytes=vmem_limit),
    )(*in_arrays)

    return out2d[:N].reshape(Gn, Tn, Dm)


# --------------------------- pure-JAX reference --------------------------------
def _reference(hidden_states, params, *, use_swish):
    h = hidden_states @ params["wi"]
    if "bi" in params:
        h = h + params["bi"]
    h = h * jax.nn.sigmoid(h) if use_swish else jnp.maximum(h, 0.0)
    y = h @ params["wo"]
    if "bo" in params:
        y = y + params["bo"]
    return y


# ----------------------------------- main --------------------------------------
if __name__ == "__main__":
    G, T, D = 2, 8, 128          # num_groups, tokens_per_group, d_model
    F_FFN, F_EXT = 256, 384      # d_ff (expert), d_ext (ext layer)

    key = jax.random.PRNGKey(0)
    ks = jax.random.split(key, 8)
    scale = 0.05

    hidden_states = jax.random.normal(ks[0], (G, T, D), jnp.float32)

    # Config 1: ext_layer=False -> ReLU, no bias (Switch-Transformer expert FFN).
    params_ffn = {
        "wi": scale * jax.random.normal(ks[1], (D, F_FFN), jnp.float32),  # torch wi.weight.T
        "wo": scale * jax.random.normal(ks[2], (F_FFN, D), jnp.float32),  # torch wo.weight.T
    }

    # Config 2: ext_layer=True -> swish (SiLU), with bias.
    params_ext = {
        "wi": scale * jax.random.normal(ks[3], (D, F_EXT), jnp.float32),
        "wo": scale * jax.random.normal(ks[4], (F_EXT, D), jnp.float32),
        "bi": scale * jax.random.normal(ks[5], (F_EXT,), jnp.float32),
        "bo": scale * jax.random.normal(ks[6], (D,), jnp.float32),
    }

    # f32-weight run with a forced 2-step d_ff reduction (tests accumulator path).
    out_ffn_f32 = jax.block_until_ready(
        gptsan_dense_act_dense(hidden_states, params_ffn, use_swish=False,
                               weight_dtype=jnp.float32, tf=128))
    # Default bf16-streaming runs (ffn: single reduction step; ext: 3 steps + bias).
    out_ffn = jax.block_until_ready(
        gptsan_dense_act_dense(hidden_states, params_ffn, use_swish=False))
    out_ext = jax.block_until_ready(
        gptsan_dense_act_dense(hidden_states, params_ext, use_swish=True))

    ref_ffn = _reference(hidden_states, params_ffn, use_swish=False)
    ref_ext = _reference(hidden_states, params_ext, use_swish=True)

    assert out_ffn_f32.shape == (G, T, D)
    assert out_ffn.shape == (G, T, D) and out_ext.shape == (G, T, D)
    assert jnp.allclose(out_ffn_f32, ref_ffn, atol=5e-3, rtol=5e-3), "f32 ffn mismatch"
    assert jnp.allclose(out_ffn, ref_ffn, atol=3e-2, rtol=3e-2), "bf16 relu/ffn mismatch"
    assert jnp.allclose(out_ext, ref_ext, atol=3e-2, rtol=3e-2), "bf16 swish/ext mismatch"

    print("KERNEL_OK")
</pallas_src>

<mosaic_0001>
module attributes {stable_mosaic.version = 11 : i64} {
  func.func @_dense_act_dense_kernel(%arg0: i32, %arg1: i32, %arg2: memref<16x128xf32, #tpu.memory_space<vmem>>, %arg3: memref<128x128xf32, #tpu.memory_space<vmem>>, %arg4: memref<128x128xf32, #tpu.memory_space<vmem>>, %arg5: memref<16x128xf32, #tpu.memory_space<vmem>>, %arg6: memref<16x128xf32, #tpu.memory_space<vmem>>) attributes {dimension_semantics = [#tpu.dimension_semantics<parallel>, #tpu.dimension_semantics<arbitrary>], iteration_bounds = array<i64: 1, 2>, scalar_prefetch = 0 : i64, scratch_operands = 1 : i64, tpu.core_type = #tpu.core_type<tc>, window_params = [{transform_indices = @transform_0, window_bounds = array<i64: 16, 128>}, {transform_indices = @transform_1, window_bounds = array<i64: 128, 128>}, {transform_indices = @transform_2, window_bounds = array<i64: 128, 128>}, {transform_indices = @transform_3, window_bounds = array<i64: 16, 128>}]} {
    %c0_i32 = arith.constant 0 : i32
    %0 = arith.cmpi eq, %arg1, %c0_i32 : i32
    %1 = arith.extui %0 : i1 to i32
    %c0_i32_0 = arith.constant 0 : i32
    %2 = arith.cmpi ne, %1, %c0_i32_0 : i32
    scf.if %2 {
      %cst_13 = arith.constant 0.000000e+00 : f32
      %16 = vector.broadcast %cst_13 : f32 to vector<16x128xf32>
      %c0_14 = arith.constant 0 : index
      %c0_15 = arith.constant 0 : index
      %17 = vector.load %arg6[%c0_14, %c0_15] : memref<16x128xf32, #tpu.memory_space<vmem>>, vector<16x128xf32>
      tpu.vector_store %arg6[%c0_14, %c0_15], %16 {strides = array<i32>} : memref<16x128xf32, #tpu.memory_space<vmem>>, vector<16x128xf32>,
    } else {
    }
    %c0 = arith.constant 0 : index
    %c0_1 = arith.constant 0 : index
    %3 = vector.load %arg2[%c0, %c0_1] : memref<16x128xf32, #tpu.memory_space<vmem>>, vector<16x128xf32>
    %c0_2 = arith.constant 0 : index
    %c0_3 = arith.constant 0 : index
    %4 = vector.load %arg3[%c0_2, %c0_3] : memref<128x128xf32, #tpu.memory_space<vmem>>, vector<128x128xf32>
    %cst = arith.constant dense<0.000000e+00> : vector<16x128xf32>
    %5 = tpu.matmul %3, %4, %cst {dimension_numbers = #tpu.dot_dimension_numbers<[1], [0], [0], [1], [0, 0, 1, 1], [], []>} : vector<16x128xf32>, vector<128x128xf32>, vector<16x128xf32> -> vector<16x128xf32>
    %cst_4 = arith.constant 0.000000e+00 : f32
    %6 = vector.broadcast %cst_4 : f32 to vector<16x128xf32>
    %7 = arith.maximumf %5, %6 : vector<16x128xf32>
    %c0_5 = arith.constant 0 : index
    %c0_6 = arith.constant 0 : index
    %8 = vector.load %arg6[%c0_5, %c0_6] : memref<16x128xf32, #tpu.memory_space<vmem>>, vector<16x128xf32>
    %c0_7 = arith.constant 0 : index
    %c0_8 = arith.constant 0 : index
    %9 = vector.load %arg4[%c0_7, %c0_8] : memref<128x128xf32, #tpu.memory_space<vmem>>, vector<128x128xf32>
    %cst_9 = arith.constant dense<0.000000e+00> : vector<16x128xf32>
    %10 = tpu.matmul %7, %9, %cst_9 {dimension_numbers = #tpu.dot_dimension_numbers<[1], [0], [0], [1], [0, 0, 1, 1], [], []>} : vector<16x128xf32>, vector<128x128xf32>, vector<16x128xf32> -> vector<16x128xf32>
    %11 = arith.addf %8, %10 : vector<16x128xf32>
    %c0_10 = arith.constant 0 : index
    %c0_11 = arith.constant 0 : index
    %12 = vector.load %arg6[%c0_10, %c0_11] : memref<16x128xf32, #tpu.memory_space<vmem>>, vector<16x128xf32>
    tpu.vector_store %arg6[%c0_10, %c0_11], %11 {strides = array<i32>} : memref<16x128xf32, #tpu.memory_space<vmem>>, vector<16x128xf32>,
    %c1_i32 = arith.constant 1 : i32
    %13 = arith.cmpi eq, %arg1, %c1_i32 : i32
    %14 = arith.extui %13 : i1 to i32
    %c0_i32_12 = arith.constant 0 : i32
    %15 = arith.cmpi ne, %14, %c0_i32_12 : i32
    scf.if %15 {
      %c0_13 = arith.constant 0 : index
      %c0_14 = arith.constant 0 : index
      %16 = vector.load %arg6[%c0_13, %c0_14] : memref<16x128xf32, #tpu.memory_space<vmem>>, vector<16x128xf32>
      %c0_15 = arith.constant 0 : index
      %c0_16 = arith.constant 0 : index
      %17 = vector.load %arg5[%c0_15, %c0_16] : memref<16x128xf32, #tpu.memory_space<vmem>>, vector<16x128xf32>
      tpu.vector_store %arg5[%c0_15, %c0_16], %16 {strides = array<i32>} : memref<16x128xf32, #tpu.memory_space<vmem>>, vector<16x128xf32>,
    } else {
    }
    return
  }
  func.func @transform_0(%arg0: i32, %arg1: i32) -> (i32, i32) {
    %c0_i32 = arith.constant 0 : i32
    %c0_i32_0 = arith.constant 0 : i32
    return %arg0, %c0_i32 : i32, i32
  }
  func.func @transform_1(%arg0: i32, %arg1: i32) -> (i32, i32) {
    %c0_i32 = arith.constant 0 : i32
    %c0_i32_0 = arith.constant 0 : i32
    return %c0_i32, %arg1 : i32, i32
  }
  func.func @transform_2(%arg0: i32, %arg1: i32) -> (i32, i32) {
    %c0_i32 = arith.constant 0 : i32
    %c0_i32_0 = arith.constant 0 : i32
    return %arg1, %c0_i32 : i32, i32
  }
  func.func @transform_3(%arg0: i32, %arg1: i32) -> (i32, i32) {
    %c0_i32 = arith.constant 0 : i32
    %c0_i32_0 = arith.constant 0 : i32
    return %arg0, %c0_i32 : i32, i32
  }
}

</mosaic_0001>

<llo_original>
// kernel: tpu_custom_call.1
$region0: #{tpu_custom_call.1}
  #allocation0 [shape = 'u32[]', space=smem, size = 0x4, offset = 0x4, fixed_abs, tag = 'smem constant byte address 0x4 - core index']
  #allocation1 [shape = 'u32[72,128]{1,0:T(1,128)}', space=vmem, size = 0x9000, scoped, tag = 'internal scratch']
  #allocation2 [shape = 'f32[16,128]{1,0:T(8,128)}', space=vmem, size = 0x2000, scoped, tag = 'scratch operand']
  %s0 = inlined_call_operand.hbm [shape: f32[16,128], index: 0, kind: input, shape index: {}]
  %s1 = inlined_call_operand.hbm [shape: f32[128,256], index: 1, kind: input, shape index: {}]
  %s2 = inlined_call_operand.hbm [shape: f32[256,128], index: 2, kind: input, shape index: {}]
  %s3 = inlined_call_operand.hbm [shape: f32[16,128], index: 3, kind: output, shape index: {}]
  %s4 = sld [smem:[#allocation0]]
  $region65: #{tpu_custom_call.1} parent=0
    _
  %s6 = ssub.s32 1, %s4
  %s7 = scalar_select 0, %s6, %s4
  $region1: #{tpu_custom_call.1} parent=0
    #allocation3 [shape = 'u8[8192]{0}', space=vmem, size = 0x2000, scoped, tag = 'input window, operand 0, single buffered']
    #allocation4 [shape = 's32[2]{0}', space=sflag, size = 0x8, scoped, tag = 'scoped memory for tpu_custom_call.1']
    #allocation5 [shape = 's32[2]{0}', space=sflag, size = 0x8, scoped, tag = 'scoped memory for tpu_custom_call.1']
    #allocation6 [shape = 'u8[131072]{0}', space=vmem, size = 0x20000, scoped, tag = 'input window, operand 1']
    #allocation7 [shape = 's32[2]{0}', space=sflag, size = 0x8, scoped, tag = 'scoped memory for tpu_custom_call.1']
    #allocation8 [shape = 'u8[131072]{0}', space=vmem, size = 0x20000, scoped, tag = 'input window, operand 2']
    #allocation9 [shape = 'u8[8192]{0}', space=vmem, size = 0x2000, scoped, tag = 'output window, operand 0, single buffered']
    %8 = vsyncpa [#allocation4], 0
    %9 = vsyncpa [#allocation7], 0
    %s10 = scalar_lea.sflag [#allocation7], 1
    %11 = vsyncpa %s10, 0
    %12 = vsyncpa [#allocation5], 0
    loop: start=0, step=1, limit=4
    $region2: #{tpu_custom_call.1} parent=1 // loop_pre_header
      _
    $region3: #{tpu_custom_call.1} parent=1 // loop_header
      %s14 = sphi 0, %s18
      %p15 = scmp.ge.s32.totalorder %s14, 4
      %s21 = sphi 0, %s33
      %s22 = sphi 0, %s29
      %s23 = sphi 0, %s21
      %s24 = sphi 0, %s22
      %s25 = sphi 0, %s23
      %s26 = sphi 0, %s24
      %s36 = sphi 0, %s38
      %s39 = sphi 0, %s36
      %s40 = sphi 0, %s39
      %s56 = sphi 0, %s40
      %s62 = sphi 0, %s64
      %s65 = sphi 0, %s62
      %s66 = sphi 0, %s65
      %s82 = sphi 0, %s66
      %s88 = sphi 0, %s90
      %s91 = sphi 0, %s88
      %s92 = sphi 0, %s91
      %s108 = sphi 0, %s92
      %s114 = sphi 0, %s116
      %s117 = sphi 0, %s114
      %s118 = sphi 0, %s117
      %s134 = sphi 0, %s118
    $region4: #{tpu_custom_call.1} parent=1 // loop_header_branch
      %17 = sbr.rel (%p15) target = $region8
    $region5: #{tpu_custom_call.1} parent=1 // loop_body
      %s19 = ssub.s32 %s14, 1
      %s20 = ssub.s32 %s14, 2
      %s27 = sadd.s32 1, %s22
      %p28 = scmp.ge.s32.totalorder %s27, 2
      %s29 = scalar_select %p28, 0, %s27
      %s30 = sadd.s32 1, %s21
      %s31 = scalar_select %p28, %s30, %s21
      %p32 = scmp.ge.s32.totalorder %s31, 1
      %s33 = scalar_select %p32, 0, %s31
      %s34 = ssub.s32 %s21, %s33
      %p35 = scmp.eq.s32.totalorder %s34, 0
      %s37 = sadd.s32 %s36, 1
      %s38 = scalar_select %p35, %s36, %s37
      %p41 = pneg %p35
      %p42 = scmp.eq.s32.totalorder %s14, 1
      %p43 = por %p41, %p42
      %p44 = scmp.ne.s32.totalorder %s36, %s39
      %p45 = scmp.eq.s32.totalorder %s14, 0
      %p46 = por %p44, %p45
      %p47 = scmp.ne.s32.totalorder %s36, %s39
      %p48 = scmp.eq.s32.totalorder %s19, 1
      %p49 = por %p47, %p48
      %p50 = scmp.ne.s32.totalorder %s39, %s40
      %p51 = scmp.eq.s32.totalorder %s19, 0
      %p52 = por %p50, %p51
      %p53 = scmp.ne.s32.totalorder %s39, %s40
      %p54 = scmp.eq.s32.totalorder %s20, 1
      %p55 = por %p53, %p54
      %p57 = scmp.ne.s32.totalorder %s40, %s56
      %p58 = scmp.eq.s32.totalorder %s20, 0
      %p59 = por %p57, %p58
      %s60 = ssub.s32 %s22, %s29
      %p61 = scmp.eq.s32.totalorder %s60, 0
      %s63 = sadd.s32 %s62, 1
      %s64 = scalar_select %p61, %s62, %s63
      %p67 = pneg %p61
      %p68 = scmp.eq.s32.totalorder %s14, 1
      %p69 = por %p67, %p68
      %p70 = scmp.ne.s32.totalorder %s62, %s65
      %p71 = scmp.eq.s32.totalorder %s14, 0
      %p72 = por %p70, %p71
      %p73 = scmp.ne.s32.totalorder %s62, %s65
      %p74 = scmp.eq.s32.totalorder %s19, 1
      %p75 = por %p73, %p74
      %p76 = scmp.ne.s32.totalorder %s65, %s66
      %p77 = scmp.eq.s32.totalorder %s19, 0
      %p78 = por %p76, %p77
      %p79 = scmp.ne.s32.totalorder %s65, %s66
      %p80 = scmp.eq.s32.totalorder %s20, 1
      %p81 = por %p79, %p80
      %p83 = scmp.ne.s32.totalorder %s66, %s82
      %p84 = scmp.eq.s32.totalorder %s20, 0
      %p85 = por %p83, %p84
      %s86 = ssub.s32 %s22, %s29
      %p87 = scmp.eq.s32.totalorder %s86, 0
      %s89 = sadd.s32 %s88, 1
      %s90 = scalar_select %p87, %s88, %s89
      %p93 = pneg %p87
      %p94 = scmp.eq.s32.totalorder %s14, 1
      %p95 = por %p93, %p94
      %p96 = scmp.ne.s32.totalorder %s88, %s91
      %p97 = scmp.eq.s32.totalorder %s14, 0
      %p98 = por %p96, %p97
      %p99 = scmp.ne.s32.totalorder %s88, %s91
      %p100 = scmp.eq.s32.totalorder %s19, 1
      %p101 = por %p99, %p100
      %p102 = scmp.ne.s32.totalorder %s91, %s92
      %p103 = scmp.eq.s32.totalorder %s19, 0
      %p104 = por %p102, %p103
      %p105 = scmp.ne.s32.totalorder %s91, %s92
      %p106 = scmp.eq.s32.totalorder %s20, 1
      %p107 = por %p105, %p106
      %p109 = scmp.ne.s32.totalorder %s92, %s108
      %p110 = scmp.eq.s32.totalorder %s20, 0
      %p111 = por %p109, %p110
      %s112 = ssub.s32 %s21, %s33
      %p113 = scmp.eq.s32.totalorder %s112, 0
      %s115 = sadd.s32 %s114, 1
      %s116 = scalar_select %p113, %s114, %s115
      %p119 = pneg %p113
      %p120 = scmp.eq.s32.totalorder %s14, 1
      %p121 = por %p119, %p120
      %p122 = scmp.ne.s32.totalorder %s114, %s117
      %p123 = scmp.eq.s32.totalorder %s14, 0
      %p124 = por %p122, %p123
      %p125 = scmp.ne.s32.totalorder %s114, %s117
      %p126 = scmp.eq.s32.totalorder %s19, 1
      %p127 = por %p125, %p126
      %p128 = scmp.ne.s32.totalorder %s117, %s118
      %p129 = scmp.eq.s32.totalorder %s19, 0
      %p130 = por %p128, %p129
      %p131 = scmp.ne.s32.totalorder %s117, %s118
      %p132 = scmp.eq.s32.totalorder %s20, 1
      %p133 = por %p131, %p132
      %p135 = scmp.ne.s32.totalorder %s118, %s134
      %p136 = scmp.eq.s32.totalorder %s20, 0
      %p137 = por %p135, %p136
      %p138 = scmp.le.s32.totalorder 1, %s14
      %p139 = scmp.lt.s32.totalorder %s14, 3
      %p140 = pnand %p138, %p139
      %p141 = pneg %p140
      // Predicated region
      $region9: #{tpu_custom_call.1} parent=5 // pred_check
        _
      $region10: #{tpu_custom_call.1} parent=5 // pred_check_branch
        %143 = sbr.rel (%p140) target = $region12
      $region11: #{tpu_custom_call.1} parent=5 // pred_region
        %s144 = ssub.s32 %s14, 1
        // Predicated region
        $region13: #{tpu_custom_call.1} parent=11 // pred_check
          %p145 = pneg %p52
        $region14: #{tpu_custom_call.1} parent=11 // pred_check_branch
          %147 = sbr.rel (%p145) target = $region16
        $region15: #{tpu_custom_call.1} parent=11 // pred_region
          %s148 = smul.u32 2, %s23
          %150 = vsyncadd [#allocation4], 0
          %s151 = smul.addr %s148, 8
          %s152 = scalar_lea.hbm %s0, %s151
          %s153 = sshll.u32 %s152, 4
          %s154 = int_to_ptr.hbm [resolvable:$true] %s153
          %s155 = sshll.u32 [#allocation3], 4
          %s156 = int_to_ptr.vmem [resolvable:$true] %s155
          %161 = dma.hbm_to_vmem [thread:$0]  %s154, 256, %s156, [#allocation4], 128, 128, 8
        $region16: #{tpu_custom_call.1} parent=11 // pred_fallthru
          _
      $region12: #{tpu_custom_call.1} parent=5 // pred_fallthru
        _
      %p162 = scmp.lt.s32.totalorder %s14, 2
      // Predicated region
      $region17: #{tpu_custom_call.1} parent=5 // pred_check
        %p163 = pneg %p162
      $region18: #{tpu_custom_call.1} parent=5 // pred_check_branch
        %165 = sbr.rel (%p163) target = $region20
      $region19: #{tpu_custom_call.1} parent=5 // pred_region
        // Predicated region
        $region21: #{tpu_custom_call.1} parent=19 // pred_check
          %p166 = pneg %p72
        $region22: #{tpu_custom_call.1} parent=19 // pred_check_branch
          %168 = sbr.rel (%p166) target = $region24
        $region23: #{tpu_custom_call.1} parent=19 // pred_region
          %s169 = sand.u32 %s14, 1
          %s170 = scalar_lea.sflag [#allocation7], %s169
          %s171 = sand.u32 %s62, 1
          %s172 = smul.addr %s171, 128
          %s173 = scalar_lea.vmem [#allocation6], %s172
          %175 = vsyncadd %s170, 0
          %s176 = smul.addr %s22, 8
          %s177 = scalar_lea.hbm %s1, %s176
          %s178 = sshll.u32 %s177, 4
          %s179 = int_to_ptr.hbm [resolvable:$true] %s178
          %s180 = sshll.u32 %s173, 4
          %s181 = int_to_ptr.vmem [resolvable:$true] %s180
          %186 = dma.hbm_to_vmem [thread:$0]  %s179, 2048, %s181, %s170, 256, 128, 8
        $region24: #{tpu_custom_call.1} parent=19 // pred_fallthru
          _
        // Predicated region
        $region25: #{tpu_custom_call.1} parent=19 // pred_check
          %p187 = pneg %p98
        $region26: #{tpu_custom_call.1} parent=19 // pred_check_branch
          %189 = sbr.rel (%p187) target = $region28
        $region27: #{tpu_custom_call.1} parent=19 // pred_region
          %s190 = sand.u32 %s14, 1
          %s191 = scalar_lea.sflag [#allocation7], %s190
          %s192 = sand.u32 %s88, 1
          %s193 = smul.addr %s192, 128
          %s194 = scalar_lea.vmem [#allocation8], %s193
          %s195 = smul.u32 16, %s22
          %197 = vsyncadd %s191, 0
          %s198 = smul.addr %s195, 8
          %s199 = scalar_lea.hbm %s2, %s198
          %s200 = sshll.u32 %s199, 4
          %s201 = int_to_ptr.hbm [resolvable:$true] %s200
          %s202 = sshll.u32 %s194, 4
          %s203 = int_to_ptr.vmem [resolvable:$true] %s202
          %208 = dma.hbm_to_vmem [thread:$0]  %s201, 2048, %s203, %s191, 128, 128, 8
        $region28: #{tpu_custom_call.1} parent=19 // pred_fallthru
          _
      $region20: #{tpu_custom_call.1} parent=5 // pred_fallthru
        _
      %p209 = scmp.le.s32.totalorder 1, %s14
      %p210 = scmp.lt.s32.totalorder %s14, 3
      %p211 = pnand %p209, %p210
      %p212 = pneg %p211
      // Predicated region
      $region29: #{tpu_custom_call.1} parent=5 // pred_check
        _
      $region30: #{tpu_custom_call.1} parent=5 // pred_check_branch
        %214 = sbr.rel (%p211) target = $region32
      $region31: #{tpu_custom_call.1} parent=5 // pred_region
        %s215 = ssub.s32 %s14, 1
        // Predicated region
        $region33: #{tpu_custom_call.1} parent=31 // pred_check
          %p216 = pneg %p52
        $region34: #{tpu_custom_call.1} parent=31 // pred_check_branch
          %218 = sbr.rel (%p216) target = $region36
        $region35: #{tpu_custom_call.1} parent=31 // pred_region
          %220 = dma.done [#allocation4], 256
        $region36: #{tpu_custom_call.1} parent=31 // pred_fallthru
          _
        %s221 = sand.u32 %s19, 1
        %s222 = scalar_lea.sflag [#allocation7], %s221
        %s223 = sand.u32 %s65, 1
        %s224 = smul.addr %s223, 128
        %s225 = scalar_lea.vmem [#allocation6], %s224
        // Predicated region
        $region37: #{tpu_custom_call.1} parent=31 // pred_check
          %p226 = pneg %p78
        $region38: #{tpu_custom_call.1} parent=31 // pred_check_branch
          %228 = sbr.rel (%p226) target = $region40
        $region39: #{tpu_custom_call.1} parent=31 // pred_region
          %230 = dma.done %s222, 2048
        $region40: #{tpu_custom_call.1} parent=31 // pred_fallthru
          _
        %s231 = sand.u32 %s19, 1
        %s232 = scalar_lea.sflag [#allocation7], %s231
        %s233 = sand.u32 %s91, 1
        %s234 = smul.addr %s233, 128
        %s235 = scalar_lea.vmem [#allocation8], %s234
        // Predicated region
        $region41: #{tpu_custom_call.1} parent=31 // pred_check
          %p236 = pneg %p104
        $region42: #{tpu_custom_call.1} parent=31 // pred_check_branch
          %238 = sbr.rel (%p236) target = $region44
        $region43: #{tpu_custom_call.1} parent=31 // pred_region
          %240 = dma.done %s232, 2048
        $region44: #{tpu_custom_call.1} parent=31 // pred_fallthru
          _
        %p241 = pneg %p52
        %p242 = pneg %p49
        %s243 = sand.u32 %s19, 1
        %s244 = scalar_lea.sflag [#allocation7], %s243
        %s245 = sand.u32 %s65, 1
        %s246 = smul.addr %s245, 128
        %s247 = scalar_lea.vmem [#allocation6], %s246
        %p248 = pneg %p78
        %p249 = pneg %p75
        %s250 = sand.u32 %s19, 1
        %s251 = scalar_lea.sflag [#allocation7], %s250
        %s252 = sand.u32 %s91, 1
        %s253 = smul.addr %s252, 128
        %s254 = scalar_lea.vmem [#allocation8], %s253
        %p255 = pneg %p104
        %p256 = pneg %p101
        %p257 = pneg %p130
        %p258 = pneg %p127
        %s259 = smul.u32 2, %s23
        %s260 = smul.u32 16, %s24
        %s261 = smul.u32 2, %s23
        %p262 = scmp.eq.s32.totalorder %s24, 0
        // Predicated region
        $region45: #{tpu_custom_call.1} parent=31 // pred_check
          %p263 = pneg %p262
        $region46: #{tpu_custom_call.1} parent=31 // pred_check_branch
          %265 = sbr.rel (%p263) target = $region48
        $region47: #{tpu_custom_call.1} parent=31 // pred_region
          %266 = vst [vmem:[#allocation2] sm:$0xff] 0.0
          %267 = vst [vmem:[#allocation2 + $0x8] sm:$0xff] 0.0
        $region48: #{tpu_custom_call.1} parent=31 // pred_fallthru
          _
        %v268 = vld [vmem:[#allocation3] sm:$0xff]
        %v269 = vld [vmem:[#allocation3 + $0x8] sm:$0xff]
        %v270 = vld [vmem:[%s225] sm:$0xff]
        %v271 = vld [vmem:[%s225 + $0x8] sm:$0xff]
        %v272 = vld [vmem:[%s225 + $0x10] sm:$0xff]
        %v273 = vld [vmem:[%s225 + $0x18] sm:$0xff]
        %v274 = vld [vmem:[%s225 + $0x20] sm:$0xff]
        %v275 = vld [vmem:[%s225 + $0x28] sm:$0xff]
        %v276 = vld [vmem:[%s225 + $0x30] sm:$0xff]
        %v277 = vld [vmem:[%s225 + $0x38] sm:$0xff]
        %v278 = vld [vmem:[%s225 + $0x40] sm:$0xff]
        %v279 = vld [vmem:[%s225 + $0x48] sm:$0xff]
        %v280 = vld [vmem:[%s225 + $0x50] sm:$0xff]
        %v281 = vld [vmem:[%s225 + $0x58] sm:$0xff]
        %v282 = vld [vmem:[%s225 + $0x60] sm:$0xff]
        %v283 = vld [vmem:[%s225 + $0x68] sm:$0xff]
        %v284 = vld [vmem:[%s225 + $0x70] sm:$0xff]
        %v285 = vld [vmem:[%s225 + $0x78] sm:$0xff]
        %286 = vmatpush.msra.mxu0 %v285
        %287 = vmatpush.msra.mxu0 %v284
        %288 = vmatpush.msra.mxu0 %v283
        %289 = vmatpush.msra.mxu0 %v282
        %290 = vmatpush.msra.mxu0 %v281
        %291 = vmatpush.msra.mxu0 %v280
        %292 = vmatpush.msra.mxu0 %v279
        %293 = vmatpush.msra.mxu0 %v278
        %294 = vmatpush.msra.mxu0 %v277
        %295 = vmatpush.msra.mxu0 %v276
        %296 = vmatpush.msra.mxu0 %v275
        %297 = vmatpush.msra.mxu0 %v274
        %298 = vmatpush.msra.mxu0 %v273
        %299 = vmatpush.msra.mxu0 %v272
        %300 = vmatpush.msra.mxu0 %v271
        %301 = vmatpush.msra.mxu0 %v270
        %302 = vmatmul.f32.gmra.mxu0 %v268
        %v303 = vpop.f32.mrf.mxu0
        %v304 = vadd.f32 0.0, %v303
        %305 = vmatmul.f32.gmra.mxu0 %v269
        %v306 = vpop.f32.mrf.mxu0
        %v307 = vadd.f32 0.0, %v306
        %308 = vdwg.mxu0
        %v309 = vmax.f32 %v304, 0.0
        %v310 = vmax.f32 %v307, 0.0
        %v311 = vld [vmem:[#allocation2] sm:$0xff]
        %v312 = vld [vmem:[#allocation2 + $0x8] sm:$0xff]
        %v313 = vld [vmem:[%s235] sm:$0xff]
        %v314 = vld [vmem:[%s235 + $0x8] sm:$0xff]
        %v315 = vld [vmem:[%s235 + $0x10] sm:$0xff]
        %v316 = vld [vmem:[%s235 + $0x18] sm:$0xff]
        %v317 = vld [vmem:[%s235 + $0x20] sm:$0xff]
        %v318 = vld [vmem:[%s235 + $0x28] sm:$0xff]
        %v319 = vld [vmem:[%s235 + $0x30] sm:$0xff]
        %v320 = vld [vmem:[%s235 + $0x38] sm:$0xff]
        %v321 = vld [vmem:[%s235 + $0x40] sm:$0xff]
        %v322 = vld [vmem:[%s235 + $0x48] sm:$0xff]
        %v323 = vld [vmem:[%s235 + $0x50] sm:$0xff]
        %v324 = vld [vmem:[%s235 + $0x58] sm:$0xff]
        %v325 = vld [vmem:[%s235 + $0x60] sm:$0xff]
        %v326 = vld [vmem:[%s235 + $0x68] sm:$0xff]
        %v327 = vld [vmem:[%s235 + $0x70] sm:$0xff]
        %v328 = vld [vmem:[%s235 + $0x78] sm:$0xff]
        %329 = vmatpush.msra.mxu0 %v328
        %330 = vmatpush.msra.mxu0 %v327
        %331 = vmatpush.msra.mxu0 %v326
        %332 = vmatpush.msra.mxu0 %v325
        %333 = vmatpush.msra.mxu0 %v324
        %334 = vmatpush.msra.mxu0 %v323
        %335 = vmatpush.msra.mxu0 %v322
        %336 = vmatpush.msra.mxu0 %v321
        %337 = vmatpush.msra.mxu0 %v320
        %338 = vmatpush.msra.mxu0 %v319
        %339 = vmatpush.msra.mxu0 %v318
        %340 = vmatpush.msra.mxu0 %v317
        %341 = vmatpush.msra.mxu0 %v316
        %342 = vmatpush.msra.mxu0 %v315
        %343 = vmatpush.msra.mxu0 %v314
        %344 = vmatpush.msra.mxu0 %v313
        %345 = vmatmul.f32.gmra.mxu0 %v309
        %v346 = vpop.f32.mrf.mxu0
        %v347 = vadd.f32 0.0, %v346
        %348 = vmatmul.f32.gmra.mxu0 %v310
        %v349 = vpop.f32.mrf.mxu0
        %v350 = vadd.f32 0.0, %v349
        %351 = vdwg.mxu0
        %v352 = vadd.f32 %v311, %v347
        %v353 = vadd.f32 %v312, %v350
        %354 = vst [vmem:[#allocation2] sm:$0xff] %v352
        %355 = vst [vmem:[#allocation2 + $0x8] sm:$0xff] %v353
        %p356 = scmp.eq.s32.totalorder %s24, 1
        // Predicated region
        $region49: #{tpu_custom_call.1} parent=31 // pred_check
          %p357 = pneg %p356
        $region50: #{tpu_custom_call.1} parent=31 // pred_check_branch
          %359 = sbr.rel (%p357) target = $region52
        $region51: #{tpu_custom_call.1} parent=31 // pred_region
          %v360 = vld [vmem:[#allocation2] sm:$0xff]
          %v361 = vld [vmem:[#allocation2 + $0x8] sm:$0xff]
          %362 = vst [vmem:[#allocation9] sm:$0xff] %v360
          %363 = vst [vmem:[#allocation9 + $0x8] sm:$0xff] %v361
        $region52: #{tpu_custom_call.1} parent=31 // pred_fallthru
          _
        // Predicated region
        $region53: #{tpu_custom_call.1} parent=31 // pred_check
          %p364 = pneg %p127
        $region54: #{tpu_custom_call.1} parent=31 // pred_check_branch
          %366 = sbr.rel (%p364) target = $region56
        $region55: #{tpu_custom_call.1} parent=31 // pred_region
          %s367 = smul.u32 2, %s23
          %369 = vsyncadd [#allocation5], 0
          %s370 = smul.addr %s367, 8
          %s371 = scalar_lea.hbm %s3, %s370
          %s372 = sshll.u32 [#allocation9], 4
          %s373 = int_to_ptr.vmem [resolvable:$true] %s372
          %s374 = sshll.u32 %s371, 4
          %s375 = int_to_ptr.hbm [resolvable:$true] %s374
          %380 = dma.vmem_to_hbm [thread:$0]  %s373, 256, %s375, [#allocation5], 128, 128, 8
        $region56: #{tpu_custom_call.1} parent=31 // pred_fallthru
          _
        // Predicated region
        $region57: #{tpu_custom_call.1} parent=31 // pred_check
          %p381 = pneg %p127
        $region58: #{tpu_custom_call.1} parent=31 // pred_check_branch
          %383 = sbr.rel (%p381) target = $region60
        $region59: #{tpu_custom_call.1} parent=31 // pred_region
          %385 = dma.done [#allocation5], 256
        $region60: #{tpu_custom_call.1} parent=31 // pred_fallthru
          _
      $region32: #{tpu_custom_call.1} parent=5 // pred_fallthru
        _
      %p386 = scmp.le.s32.totalorder 2, %s14
      // Predicated region
      $region61: #{tpu_custom_call.1} parent=5 // pred_check
        %p387 = pneg %p386
      $region62: #{tpu_custom_call.1} parent=5 // pred_check_branch
        %389 = sbr.rel (%p387) target = $region64
      $region63: #{tpu_custom_call.1} parent=5 // pred_region
        %s390 = ssub.s32 %s14, 2
      $region64: #{tpu_custom_call.1} parent=5 // pred_fallthru
        _
    $region6: #{tpu_custom_call.1} parent=1 // loop_footer
      %s18 = sadd.s32 1, %s14
    $region7: #{tpu_custom_call.1} parent=1 // loop_footer_branch
      %13 = sbr.rel target = $region3
    $region8: #{tpu_custom_call.1} parent=1 // loop_exit
      _
    %391 = vsyncpa [#allocation4], 1
    %s392 = scalar_lea.sflag [#allocation4], 1
    %393 = vsyncpa %s392, 1
    %394 = vsyncpa [#allocation7], 1
    %s395 = scalar_lea.sflag [#allocation7], 1
    %396 = vsyncpa %s395, 1
    %397 = vsyncpa [#allocation5], 1
    %s398 = scalar_lea.sflag [#allocation5], 1
    %399 = vsyncpa %s398, 1

</llo_original>
